<compile_context>
chip_gen: v7x
topology: tpu7x:2x2x1
jax: 0.10.0
libtpu: 0.0.40
codegen_flags: <defaults>
</compile_context>

<pallas_src>
import math

import jax
import jax.numpy as jnp
from jax.experimental import pallas as pl
from jax.experimental.pallas import tpu as pltpu

_LANES = 128


# --------------------------------------------------------------------------
# Kernel
# --------------------------------------------------------------------------
def _bounded_transform_kernel(x_ref, scale_ref, loc_ref, y_ref):
    """One [tb, 128] lane-packed tile of BoundedTransform.forward.

    x/y:        [tb, 128]  (G batch rows folded into the 128 lanes)
    scale/loc:  [1, 128]   per-lane action scale / offset (tiled to the packed layout)
    """
    y_ref[...] = jnp.tanh(x_ref[...]) * scale_ref[...] + loc_ref[...]


# --------------------------------------------------------------------------
# Packing helpers (free or cheap wrapper-side layout plumbing)
# --------------------------------------------------------------------------
def _packing_plan(B, A, block_rows=2048):
    """Choose padded action dim, lane-fold factor, tile size and grid steps.

    Returns (a_pad, G, bp, rp, tb, n_steps) with rp = n_steps * tb packed rows and
    bp = rp * G padded batch rows.  Padding is kept below 8 * n_steps rows.
    """
    assert A >= 1
    a_pad = 1 << max(0, (A - 1).bit_length())      # next power of two
    assert a_pad <= _LANES, "action dim > 128 not supported"
    G = _LANES // a_pad                            # batch rows folded per packed row
    block_rows = max(8, (block_rows // 8) * 8)

    rp = -(-B // G)                                # packed rows actually needed
    rp = -(-rp // 8) * 8                           # sublane-align
    # >=2 grid steps whenever there is more than one sublane group of rows, so the
    # "parallel" grid axis can shard across both TensorCores on v7x.
    n_steps = max(-(-rp // block_rows), 2 if rp >= 16 else 1)
    tb = -(-rp // (8 * n_steps)) * 8               # tile rows, multiple of 8
    rp = n_steps * tb                              # <8*n_steps rows of padding total
    bp = rp * G
    return a_pad, G, bp, rp, tb, n_steps


def _pack(x, bp, a_pad):
    """[B, A] f32 -> (zero-padded) [bp, a_pad] -> folded [bp*a_pad/128, 128]."""
    B, A = x.shape
    if bp != B or a_pad != A:
        x = jnp.pad(x, ((0, bp - B), (0, a_pad - A)))
    return x.reshape((bp * a_pad) // _LANES, _LANES)


def _const_row(v, a_pad, pad_value):
    """[A] -> per-lane [1, 128] row matching the packed layout (lane l -> l % a_pad)."""
    v = v.reshape(-1).astype(jnp.float32)
    A = v.shape[0]
    if a_pad != A:
        v = jnp.concatenate([v, jnp.full((a_pad - A,), pad_value, jnp.float32)])
    return jnp.tile(v, _LANES // a_pad).reshape(1, _LANES)


# --------------------------------------------------------------------------
# Wrapper
# --------------------------------------------------------------------------
def bounded_transform_forward(x, scale, loc, block_rows: int = 2048):
    """Exact BoundedTransform.forward: tanh(x) * scale[None, :] + loc[None, :]."""
    B, A = x.shape
    x = x.astype(jnp.float32)
    a_pad, G, bp, rp, tb, n_steps = _packing_plan(B, A, block_rows)

    x_p = _pack(x, bp, a_pad)
    scale_row = _const_row(scale, a_pad, 1.0)
    loc_row = _const_row(loc, a_pad, 0.0)

    row_spec = pl.BlockSpec((tb, _LANES), lambda i: (i, 0))
    const_row_spec = pl.BlockSpec((1, _LANES), lambda i: (0, 0))

    n_elem = rp * _LANES
    cost = pl.CostEstimate(
        flops=int(2 * n_elem),
        transcendentals=int(n_elem),
        bytes_accessed=int(4 * (2 * n_elem + 2 * _LANES)),
    )

    y_p = pl.pallas_call(
        _bounded_transform_kernel,
        grid=(n_steps,),
        out_shape=jax.ShapeDtypeStruct((rp, _LANES), jnp.float32),
        in_specs=[row_spec, const_row_spec, const_row_spec],
        out_specs=row_spec,
        compiler_params=pltpu.CompilerParams(
            dimension_semantics=("parallel",)),
        cost_estimate=cost,
    )(x_p, scale_row, loc_row)

    # Unpack (free contiguous reshape) and drop padding.
    return y_p.reshape(bp, a_pad)[:B, :A]


# --------------------------------------------------------------------------
# Pure-JAX reference
# --------------------------------------------------------------------------
def _reference(x, scale, loc):
    return jnp.tanh(x) * scale[None, :] + loc[None, :]


if __name__ == "__main__":
    def run_case(B, A, seed):
        key = jax.random.PRNGKey(seed)
        k_x, _ = jax.random.split(key)
        x = jax.random.normal(k_x, (B, A), dtype=jnp.float32) * 3.0

        # Box space bounds -> loc / scale, exactly as the module's __init__.
        low = jnp.linspace(-2.0, -1.0, A, dtype=jnp.float32)
        high = jnp.linspace(1.0, 3.0, A, dtype=jnp.float32)
        loc = (high + low) / 2.0
        scale = (high - low) / 2.0

        y = bounded_transform_forward(x, scale, loc)
        jax.block_until_ready(y)

        y_ref = _reference(x, scale, loc)
        assert y.shape == y_ref.shape, "shape mismatch"
        assert jnp.allclose(y, y_ref, atol=1e-5, rtol=1e-5), "bounded transform mismatch"

    run_case(B=2, A=4, seed=0)     # tiny shape from the spec; no padding beyond sublane align
    run_case(B=37, A=5, seed=1)    # exercises action-dim + batch zero-padding path
    run_case(B=512, A=8, seed=2)   # exact packed fit: no wrapper-side pad copy, 2 grid steps
    print("KERNEL_OK")
</pallas_src>

<mosaic_0001>
module attributes {stable_mosaic.version = 11 : i64} {
  func.func @_bounded_transform_kernel(%arg0: i32, %arg1: memref<8x128xf32, #tpu.memory_space<vmem>>, %arg2: memref<1x128xf32, #tpu.memory_space<vmem>>, %arg3: memref<1x128xf32, #tpu.memory_space<vmem>>, %arg4: memref<8x128xf32, #tpu.memory_space<vmem>>) attributes {dimension_semantics = [#tpu.dimension_semantics<parallel>], iteration_bounds = array<i64: 1>, scalar_prefetch = 0 : i64, scratch_operands = 0 : i64, tpu.core_type = #tpu.core_type<tc>, window_params = [{transform_indices = @transform_0, window_bounds = array<i64: 8, 128>}, {pipeline_mode = #tpu.pipeline_mode<synchronous>, transform_indices = @transform_1, window_bounds = array<i64: 1, 128>}, {pipeline_mode = #tpu.pipeline_mode<synchronous>, transform_indices = @transform_2, window_bounds = array<i64: 1, 128>}, {transform_indices = @transform_3, window_bounds = array<i64: 8, 128>}]} {
    %c0 = arith.constant 0 : index
    %c0_0 = arith.constant 0 : index
    %0 = vector.load %arg1[%c0, %c0_0] : memref<8x128xf32, #tpu.memory_space<vmem>>, vector<8x128xf32>
    %1 = math.tanh %0 : vector<8x128xf32>
    %c0_1 = arith.constant 0 : index
    %c0_2 = arith.constant 0 : index
    %2 = vector.load %arg2[%c0_1, %c0_2] : memref<1x128xf32, #tpu.memory_space<vmem>>, vector<1x128xf32>
    %3 = vector.broadcast %2 : vector<1x128xf32> to vector<8x128xf32>
    %4 = arith.mulf %1, %3 : vector<8x128xf32>
    %c0_3 = arith.constant 0 : index
    %c0_4 = arith.constant 0 : index
    %5 = vector.load %arg3[%c0_3, %c0_4] : memref<1x128xf32, #tpu.memory_space<vmem>>, vector<1x128xf32>
    %6 = vector.broadcast %5 : vector<1x128xf32> to vector<8x128xf32>
    %7 = arith.addf %4, %6 : vector<8x128xf32>
    %c0_5 = arith.constant 0 : index
    %c0_6 = arith.constant 0 : index
    %8 = vector.load %arg4[%c0_5, %c0_6] : memref<8x128xf32, #tpu.memory_space<vmem>>, vector<8x128xf32>
    tpu.vector_store %arg4[%c0_5, %c0_6], %7 {strides = array<i32>} : memref<8x128xf32, #tpu.memory_space<vmem>>, vector<8x128xf32>,
    return
  }
  func.func @transform_0(%arg0: i32) -> (i32, i32) {
    %c0_i32 = arith.constant 0 : i32
    %c0_i32_0 = arith.constant 0 : i32
    return %arg0, %c0_i32 : i32, i32
  }
  func.func @transform_1(%arg0: i32) -> (i32, i32) {
    %c0_i32 = arith.constant 0 : i32
    %c0_i32_0 = arith.constant 0 : i32
    %c0_i32_1 = arith.constant 0 : i32
    return %c0_i32, %c0_i32_0 : i32, i32
  }
  func.func @transform_2(%arg0: i32) -> (i32, i32) {
    %c0_i32 = arith.constant 0 : i32
    %c0_i32_0 = arith.constant 0 : i32
    %c0_i32_1 = arith.constant 0 : i32
    return %c0_i32, %c0_i32_0 : i32, i32
  }
  func.func @transform_3(%arg0: i32) -> (i32, i32) {
    %c0_i32 = arith.constant 0 : i32
    %c0_i32_0 = arith.constant 0 : i32
    return %arg0, %c0_i32 : i32, i32
  }
}

</mosaic_0001>

<llo_original>
// kernel: tpu_custom_call.1
$region0: #{tpu_custom_call.1}
  #allocation0 [shape = 'u32[]', space=smem, size = 0x4, offset = 0x4, fixed_abs, tag = 'smem constant byte address 0x4 - core index']
  #allocation1 [shape = 'u32[144,128]{1,0:T(1,128)}', space=vmem, size = 0x12000, scoped, tag = 'internal scratch']
  %s0 = inlined_call_operand.hbm [shape: f32[8,128], index: 0, kind: input, shape index: {}]
  %s1 = inlined_call_operand.vmem [shape: f32[1,128], index: 1, kind: input, shape index: {}]
  %s2 = inlined_call_operand.vmem [shape: f32[1,128], index: 2, kind: input, shape index: {}]
  %s3 = inlined_call_operand.hbm [shape: f32[8,128], index: 3, kind: output, shape index: {}]
  %s4 = sld [smem:[#allocation0]]
  $region26: #{tpu_custom_call.1} parent=0
    _
  %s6 = ssub.s32 1, %s4
  %s7 = scalar_select 0, %s6, %s4
  $region1: #{tpu_custom_call.1} parent=0
    #allocation2 [shape = 'u8[4096]{0}', space=vmem, size = 0x1000, scoped, tag = 'input window, operand 0, single buffered']
    #allocation3 [shape = 's32[1]{0}', space=sflag, size = 0x4, scoped, tag = 'scoped memory for tpu_custom_call.1']
    #allocation4 [shape = 's32[1]{0}', space=sflag, size = 0x4, scoped, tag = 'scoped memory for tpu_custom_call.1']
    #allocation5 [shape = 'u8[4096]{0}', space=vmem, size = 0x1000, scoped, tag = 'output window, operand 0, single buffered']
    %8 = vsyncpa [#allocation3], 0
    %9 = vsyncpa [#allocation4], 0
    // Predicated region
    $region2: #{tpu_custom_call.1} parent=1 // pred_check
      _
    $region3: #{tpu_custom_call.1} parent=1 // pred_check_branch
      %11 = sbr.rel (0) target = $region5
    $region4: #{tpu_custom_call.1} parent=1 // pred_region
      %s13 = ssub.s32 128, 128
      %14 = vsyncadd [#allocation3], %s13
      %s16 = sshll.u32 [#allocation2], 4
      %s17 = int_to_ptr.vmem [resolvable:$true] %s16
      %19 = dma.hbm_to_vmem [thread:$0]  %s0, 128, %s17, [#allocation3]
    $region5: #{tpu_custom_call.1} parent=1 // pred_fallthru
      _
    // Predicated region
    $region6: #{tpu_custom_call.1} parent=1 // pred_check
      _
    $region7: #{tpu_custom_call.1} parent=1 // pred_check_branch
      %21 = sbr.rel (0) target = $region9
    $region8: #{tpu_custom_call.1} parent=1 // pred_region
      _
    $region9: #{tpu_custom_call.1} parent=1 // pred_fallthru
      _
    // Predicated region
    $region10: #{tpu_custom_call.1} parent=1 // pred_check
      _
    $region11: #{tpu_custom_call.1} parent=1 // pred_check_branch
      %23 = sbr.rel (0) target = $region13
    $region12: #{tpu_custom_call.1} parent=1 // pred_region
      _
    $region13: #{tpu_custom_call.1} parent=1 // pred_fallthru
      _
    // Predicated region
    $region14: #{tpu_custom_call.1} parent=1 // pred_check
      _
    $region15: #{tpu_custom_call.1} parent=1 // pred_check_branch
      %25 = sbr.rel (0) target = $region17
    $region16: #{tpu_custom_call.1} parent=1 // pred_region
      %26 = dma.done [#allocation3], 128
    $region17: #{tpu_custom_call.1} parent=1 // pred_fallthru
      _
    %v27 = vld [vmem:[#allocation2] sm:$0xff]
    %v28 = vtanh.pop %v27
    %v29 = vld [vmem:[%s1] sm:$0x1]
    %v31 = vlaneseq
    %v32 = vshrl.u32 %v31, 7
    %v33 = vsub.s32 0, %v32
    %v34 = vrot.slane %v29, %v33
    %v36 = vmul.f32 %v28, %v34
    %v37 = vld [vmem:[%s2] sm:$0x1]
    %v39 = vlaneseq
    %v40 = vshrl.u32 %v39, 7
    %v41 = vsub.s32 0, %v40
    %v42 = vrot.slane %v37, %v41
    %v44 = vadd.f32 %v36, %v42
    %45 = vst [vmem:[#allocation5] sm:$0xff] %v44
    // Predicated region
    $region18: #{tpu_custom_call.1} parent=1 // pred_check
      _
    $region19: #{tpu_custom_call.1} parent=1 // pred_check_branch
      %47 = sbr.rel (0) target = $region21
    $region20: #{tpu_custom_call.1} parent=1 // pred_region
      %s49 = ssub.s32 128, 128
      %50 = vsyncadd [#allocation4], %s49
      %s52 = sshll.u32 [#allocation5], 4
      %s53 = int_to_ptr.vmem [resolvable:$true] %s52
      %55 = dma.vmem_to_hbm [thread:$0]  %s53, 128, %s3, [#allocation4]
    $region21: #{tpu_custom_call.1} parent=1 // pred_fallthru
      _
    // Predicated region
    $region22: #{tpu_custom_call.1} parent=1 // pred_check
      _
    $region23: #{tpu_custom_call.1} parent=1 // pred_check_branch
      %57 = sbr.rel (0) target = $region25
    $region24: #{tpu_custom_call.1} parent=1 // pred_region
      %58 = dma.done [#allocation4], 128
    $region25: #{tpu_custom_call.1} parent=1 // pred_fallthru
      _
    %59 = vsyncpa [#allocation3], 1
    %60 = vsyncpa [#allocation4], 1

</llo_original>
